<compile_context>
chip_gen: v6e
topology: v6e:2x2x1
jax: 0.10.0
libtpu: 0.0.40
codegen_flags: <defaults>
</compile_context>

<pallas_src>
import jax
import jax.numpy as jnp
from jax.experimental import pallas as pl
from jax.experimental.pallas import tpu as pltpu

TIME_EMBEDDING_MULTIPLIER = 4

# Per-step VMEM working-set budget (double-buffered blocks). Safe under the
# default scoped-VMEM limit on every generation (v5e 16 MiB is raised via
# vmem_limit_bytes below; v6e/v7x default 32 MiB).
_VMEM_STEP_BUDGET = 28 << 20


def _silu(h):
    # h * sigmoid(h); exp + approx reciprocal both ride the EUP slot.
    return h * pl.reciprocal(1.0 + jnp.exp(-h), approx=True)


def _fused_kernel(x_ref, w1_ref, b1_ref, w2_ref, b2_ref, o_ref):
    """nk == 1 path: full contraction in one step, no accumulator scratch.

    x_ref  : (B, n_embd)   activations (resident)
    w1_ref : (n_embd, H)   full proj1 weight (resident across j)
    b1_ref : (1, H)        proj1 bias
    w2_ref : (H, TN)       j-th column tile of proj2 weight
    b2_ref : (1, TN)       j-th chunk of proj2 bias
    o_ref  : (B, TN)       j-th output column tile
    """
    h = jnp.dot(x_ref[...], w1_ref[...], preferred_element_type=jnp.float32)
    h = _silu(h + b1_ref[...].astype(jnp.float32))
    out = jnp.dot(h.astype(w2_ref.dtype), w2_ref[...],
                  preferred_element_type=jnp.float32)
    o_ref[...] = (out + b2_ref[...].astype(jnp.float32)).astype(o_ref.dtype)


def _chunked_kernel(x_ref, w1_ref, b1_ref, w2_ref, b2_ref, o_ref, acc_ref):
    """Fallback for very large H: hidden dim streamed in TK-chunks.

    SiLU is elementwise over h, so per-chunk bias1 + SiLU is exact; partial
    h_chunk @ w2 accumulates into a f32 VMEM scratch across the k axis.
    """
    k = pl.program_id(1)

    @pl.when(k == 0)
    def _init():
        acc_ref[...] = jnp.zeros_like(acc_ref)

    h = jnp.dot(x_ref[...], w1_ref[...], preferred_element_type=jnp.float32)
    h = _silu(h + b1_ref[...].astype(jnp.float32))
    acc_ref[...] += jnp.dot(h.astype(w2_ref.dtype), w2_ref[...],
                            preferred_element_type=jnp.float32)

    @pl.when(k == pl.num_programs(1) - 1)
    def _finalize():
        o_ref[...] = (acc_ref[...]
                      + b2_ref[...].astype(jnp.float32)).astype(o_ref.dtype)


def _num_tensorcores():
    """2 TensorCores per chip only on v7x; v5e/v6e have one. Defensive probe."""
    try:
        kind = (jax.devices()[0].device_kind or "").lower()
    except Exception:
        kind = ""
    return 2 if "v7" in kind else 1


def _vmem_step_bytes(B, n_embd, tk, tn, w_isz, x_isz, o_isz, nk):
    """Double-buffered per-step VMEM bytes for a given (tk, tn) tiling."""
    b = 2 * B * n_embd * x_isz            # x
    b += 2 * n_embd * tk * w_isz          # w1 chunk
    b += 2 * tk * 4                       # b1 chunk (f32)
    b += 2 * tk * tn * w_isz              # w2 tile
    b += 2 * tn * 4                       # b2 chunk (f32)
    b += 2 * B * tn * o_isz               # out tile
    if nk > 1:
        b += B * tn * 4                   # f32 accumulator scratch
    return b


def _pick_tiles(B, n_embd, H, num_cores, w_isz, x_isz, o_isz):
    """Pick (tk, tn): prefer tk == H (resident w1, fused kernel); split output
    columns only across real TensorCores (v7x), staying 128-lane aligned."""
    nj = num_cores if (num_cores > 1 and H % (128 * num_cores) == 0) else 1
    tn = H // nj
    # Candidate contraction chunks: H itself, then multiples of 128 dividing H.
    candidates = [H] + [d for d in range((H // 128) * 128, 127, -128)
                        if d < H and H % d == 0]
    for tk in candidates:
        nk = H // tk
        if _vmem_step_bytes(B, n_embd, tk, tn, w_isz, x_isz, o_isz, nk) \
                <= _VMEM_STEP_BUDGET:
            return tk, tn
    return candidates[-1], tn


def time_embedding(x, w1, b1, w2, b2, *, tk=None, tn=None):
    """out = SiLU(x @ w1 + b1) @ w2 + b2.

    x: (B, n_embd); w1: (n_embd, H); b1: (1, H); w2: (H, H); b2: (1, H).
    Weights may be bf16 (recommended; halves HBM traffic) or f32.
    """
    B, n_embd = x.shape
    H = w1.shape[1]
    assert w1.shape == (n_embd, H)
    assert b1.shape == (1, H)
    assert w2.shape == (H, H)
    assert b2.shape == (1, H)

    out_dtype = x.dtype
    # Cast activations to the weight compute dtype once, wrapper-side.
    xc = x.astype(w1.dtype)

    w_isz = jnp.dtype(w1.dtype).itemsize
    x_isz = jnp.dtype(xc.dtype).itemsize
    o_isz = jnp.dtype(out_dtype).itemsize

    auto_tk, auto_tn = _pick_tiles(B, n_embd, H, _num_tensorcores(),
                                   w_isz, x_isz, o_isz)
    tk = auto_tk if tk is None else tk
    tn = auto_tn if tn is None else tn
    assert H % tk == 0 and H % tn == 0
    nk = H // tk   # contraction chunks (reduction axis, innermost)
    nj = H // tn   # output-column tiles (independent, megacore-shardable)

    step_bytes = _vmem_step_bytes(B, n_embd, tk, tn, w_isz, x_isz, o_isz, nk)
    vmem_limit = int(min(max(step_bytes * 5 // 4, 16 << 20), 48 << 20))

    # Advisory cost estimate for XLA's scheduler (proj1 is recomputed per j).
    cost = pl.CostEstimate(
        flops=int(2 * B * n_embd * H * nj + 2 * B * H * H),
        transcendentals=int(B * H * nj),
        bytes_accessed=int(xc.size * x_isz
                           + (w1.size * w_isz + b1.size * 4) * nj
                           + w2.size * w_isz + b2.size * 4
                           + B * H * o_isz),
    )

    out_shape = jax.ShapeDtypeStruct((B, H), out_dtype)

    if nk == 1:
        # Fused path: w1/b1/x are constant blocks (resident); only w2/b2/out
        # walk the j axis.
        return pl.pallas_call(
            _fused_kernel,
            out_shape=out_shape,
            grid=(nj,),
            in_specs=[
                pl.BlockSpec((B, n_embd), lambda j: (0, 0)),   # x (resident)
                pl.BlockSpec((n_embd, H), lambda j: (0, 0)),   # w1 (resident)
                pl.BlockSpec((1, H), lambda j: (0, 0)),        # b1 (resident)
                pl.BlockSpec((H, tn), lambda j: (0, j)),       # w2 column tile
                pl.BlockSpec((1, tn), lambda j: (0, j)),       # b2 chunk
            ],
            out_specs=pl.BlockSpec((B, tn), lambda j: (0, j)),
            compiler_params=pltpu.CompilerParams(
                dimension_semantics=("parallel",),
                vmem_limit_bytes=vmem_limit),
            cost_estimate=cost,
        )(xc, w1, b1, w2, b2)

    # Chunked fallback (very large H only): accumulate over k in f32 scratch.
    return pl.pallas_call(
        _chunked_kernel,
        out_shape=out_shape,
        grid=(nj, nk),
        in_specs=[
            pl.BlockSpec((B, n_embd), lambda j, k: (0, 0)),    # x (resident)
            pl.BlockSpec((n_embd, tk), lambda j, k: (0, k)),   # w1 column chunk
            pl.BlockSpec((1, tk), lambda j, k: (0, k)),        # b1 chunk
            pl.BlockSpec((tk, tn), lambda j, k: (k, j)),       # w2 tile
            pl.BlockSpec((1, tn), lambda j, k: (0, j)),        # b2 chunk
        ],
        out_specs=pl.BlockSpec((B, tn), lambda j, k: (0, j)),
        scratch_shapes=[pltpu.VMEM((B, tn), jnp.float32)],
        compiler_params=pltpu.CompilerParams(
            dimension_semantics=("parallel", "arbitrary"),
            vmem_limit_bytes=vmem_limit),
        cost_estimate=cost,
    )(xc, w1, b1, w2, b2)


def init_params(key, n_embd, weight_dtype=jnp.bfloat16):
    """Deterministic synthetic params matching torch.nn.Linear shapes
    (stored transposed as (in, out)); weights in bf16, biases in f32."""
    H = TIME_EMBEDDING_MULTIPLIER * n_embd
    k1, k2, k3, k4 = jax.random.split(key, 4)
    w1 = (jax.random.normal(k1, (n_embd, H), jnp.float32)
          / jnp.sqrt(n_embd)).astype(weight_dtype)
    b1 = jax.random.normal(k2, (1, H), jnp.float32) * 0.01
    w2 = (jax.random.normal(k3, (H, H), jnp.float32)
          / jnp.sqrt(H)).astype(weight_dtype)
    b2 = jax.random.normal(k4, (1, H), jnp.float32) * 0.01
    return w1, b1, w2, b2


def reference(x, w1, b1, w2, b2):
    """Pure-JAX reference (f32 math on the same stored weights)."""
    h = x.astype(jnp.float32) @ w1.astype(jnp.float32) + b1
    h = h * jax.nn.sigmoid(h)
    return h @ w2.astype(jnp.float32) + b2


if __name__ == "__main__":
    key = jax.random.PRNGKey(0)

    # --- Test 1: default (fused, nk == 1) path at module-consistent sizes. ---
    kx1, kp1, kx2, kp2 = jax.random.split(key, 4)
    B, n_embd = 2, 32                     # hidden H = 4 * 32 = 128 (lane-dense)
    x1 = jax.random.normal(kx1, (B, n_embd), jnp.float32)
    p1 = init_params(kp1, n_embd)
    out1 = jax.block_until_ready(time_embedding(x1, *p1))
    ref1 = reference(x1, *p1)
    assert out1.shape == (B, TIME_EMBEDDING_MULTIPLIER * n_embd)
    # bf16 weights + bf16 activation operands + approx reciprocal -> loose tol.
    assert jnp.allclose(out1, ref1, atol=3e-2, rtol=3e-2), "fused path mismatch"

    # --- Test 2: force the chunked/accumulating + j-tiled path (nk>1, nj>1). ---
    n_embd2 = 64                          # H = 256
    x2 = jax.random.normal(kx2, (B, n_embd2), jnp.float32)
    p2 = init_params(kp2, n_embd2)
    out2 = jax.block_until_ready(time_embedding(x2, *p2, tk=128, tn=128))
    ref2 = reference(x2, *p2)
    assert out2.shape == (B, TIME_EMBEDDING_MULTIPLIER * n_embd2)
    assert jnp.allclose(out2, ref2, atol=3e-2, rtol=3e-2), "chunked path mismatch"

    print("KERNEL_OK")
</pallas_src>

<mosaic_0001>
module attributes {stable_mosaic.version = 11 : i64} {
  func.func @_fused_kernel(%arg0: i32, %arg1: memref<2x32xbf16, #tpu.memory_space<vmem>>, %arg2: memref<32x128xbf16, #tpu.memory_space<vmem>>, %arg3: memref<1x128xf32, #tpu.memory_space<vmem>>, %arg4: memref<128x128xbf16, #tpu.memory_space<vmem>>, %arg5: memref<1x128xf32, #tpu.memory_space<vmem>>, %arg6: memref<2x128xf32, #tpu.memory_space<vmem>>) attributes {dimension_semantics = [#tpu.dimension_semantics<parallel>], iteration_bounds = array<i64: 1>, scalar_prefetch = 0 : i64, scratch_operands = 0 : i64, tpu.core_type = #tpu.core_type<tc>, window_params = [{pipeline_mode = #tpu.pipeline_mode<synchronous>, transform_indices = @transform_0, window_bounds = array<i64: 2, 32>}, {pipeline_mode = #tpu.pipeline_mode<synchronous>, transform_indices = @transform_1, window_bounds = array<i64: 32, 128>}, {pipeline_mode = #tpu.pipeline_mode<synchronous>, transform_indices = @transform_2, window_bounds = array<i64: 1, 128>}, {transform_indices = @transform_3, window_bounds = array<i64: 128, 128>}, {transform_indices = @transform_4, window_bounds = array<i64: 1, 128>}, {transform_indices = @transform_5, window_bounds = array<i64: 2, 128>}]} {
    %c0 = arith.constant 0 : index
    %c0_0 = arith.constant 0 : index
    %0 = vector.load %arg1[%c0, %c0_0] : memref<2x32xbf16, #tpu.memory_space<vmem>>, vector<2x32xbf16>
    %c0_1 = arith.constant 0 : index
    %c0_2 = arith.constant 0 : index
    %1 = vector.load %arg2[%c0_1, %c0_2] : memref<32x128xbf16, #tpu.memory_space<vmem>>, vector<32x128xbf16>
    %cst = arith.constant dense<0.000000e+00> : vector<2x128xf32>
    %2 = tpu.matmul %0, %1, %cst {dimension_numbers = #tpu.dot_dimension_numbers<[1], [0], [0], [1], [0, 0, 1, 1], [], []>} : vector<2x32xbf16>, vector<32x128xbf16>, vector<2x128xf32> -> vector<2x128xf32>
    %c0_3 = arith.constant 0 : index
    %c0_4 = arith.constant 0 : index
    %3 = vector.load %arg3[%c0_3, %c0_4] : memref<1x128xf32, #tpu.memory_space<vmem>>, vector<1x128xf32>
    %4 = vector.broadcast %3 : vector<1x128xf32> to vector<2x128xf32>
    %5 = arith.addf %2, %4 : vector<2x128xf32>
    %cst_5 = arith.constant 0.000000e+00 : f32
    %6 = vector.broadcast %cst_5 : f32 to vector<2x128xf32>
    %7 = arith.subf %6, %5 : vector<2x128xf32>
    %8 = math.exp %7 : vector<2x128xf32>
    %cst_6 = arith.constant 1.000000e+00 : f32
    %9 = vector.broadcast %cst_6 : f32 to vector<2x128xf32>
    %10 = arith.addf %9, %8 : vector<2x128xf32>
    %11 = tpu.reciprocal %10 {approx = true} : vector<2x128xf32> -> vector<2x128xf32>
    %12 = arith.mulf %5, %11 : vector<2x128xf32>
    %13 = arith.truncf %12 : vector<2x128xf32> to vector<2x128xbf16>
    %c0_7 = arith.constant 0 : index
    %c0_8 = arith.constant 0 : index
    %14 = vector.load %arg4[%c0_7, %c0_8] : memref<128x128xbf16, #tpu.memory_space<vmem>>, vector<128x128xbf16>
    %cst_9 = arith.constant dense<0.000000e+00> : vector<2x128xf32>
    %15 = tpu.matmul %13, %14, %cst_9 {dimension_numbers = #tpu.dot_dimension_numbers<[1], [0], [0], [1], [0, 0, 1, 1], [], []>} : vector<2x128xbf16>, vector<128x128xbf16>, vector<2x128xf32> -> vector<2x128xf32>
    %c0_10 = arith.constant 0 : index
    %c0_11 = arith.constant 0 : index
    %16 = vector.load %arg5[%c0_10, %c0_11] : memref<1x128xf32, #tpu.memory_space<vmem>>, vector<1x128xf32>
    %17 = vector.broadcast %16 : vector<1x128xf32> to vector<2x128xf32>
    %18 = arith.addf %15, %17 : vector<2x128xf32>
    %c0_12 = arith.constant 0 : index
    %c0_13 = arith.constant 0 : index
    %19 = vector.load %arg6[%c0_12, %c0_13] : memref<2x128xf32, #tpu.memory_space<vmem>>, vector<2x128xf32>
    tpu.vector_store %arg6[%c0_12, %c0_13], %18 {strides = array<i32>} : memref<2x128xf32, #tpu.memory_space<vmem>>, vector<2x128xf32>,
    return
  }
  func.func @transform_0(%arg0: i32) -> (i32, i32) {
    %c0_i32 = arith.constant 0 : i32
    %c0_i32_0 = arith.constant 0 : i32
    %c0_i32_1 = arith.constant 0 : i32
    return %c0_i32, %c0_i32_0 : i32, i32
  }
  func.func @transform_1(%arg0: i32) -> (i32, i32) {
    %c0_i32 = arith.constant 0 : i32
    %c0_i32_0 = arith.constant 0 : i32
    %c0_i32_1 = arith.constant 0 : i32
    return %c0_i32, %c0_i32_0 : i32, i32
  }
  func.func @transform_2(%arg0: i32) -> (i32, i32) {
    %c0_i32 = arith.constant 0 : i32
    %c0_i32_0 = arith.constant 0 : i32
    %c0_i32_1 = arith.constant 0 : i32
    return %c0_i32, %c0_i32_0 : i32, i32
  }
  func.func @transform_3(%arg0: i32) -> (i32, i32) {
    %c0_i32 = arith.constant 0 : i32
    %c0_i32_0 = arith.constant 0 : i32
    return %c0_i32, %arg0 : i32, i32
  }
  func.func @transform_4(%arg0: i32) -> (i32, i32) {
    %c0_i32 = arith.constant 0 : i32
    %c0_i32_0 = arith.constant 0 : i32
    return %c0_i32, %arg0 : i32, i32
  }
  func.func @transform_5(%arg0: i32) -> (i32, i32) {
    %c0_i32 = arith.constant 0 : i32
    %c0_i32_0 = arith.constant 0 : i32
    return %c0_i32, %arg0 : i32, i32
  }
}

</mosaic_0001>

<llo_original>
// kernel: tpu_custom_call.1
$region0: #{tpu_custom_call.1}
  #allocation0 [shape = 'u32[]', space=smem, size = 0x4, offset = 0x4, fixed_abs, tag = 'smem constant byte address 0x4 - core index']
  #allocation1 [shape = 'u32[144,128]{1,0:T(1,128)}', space=vmem, size = 0x12000, scoped, tag = 'internal scratch']
  %s0 = inlined_call_operand.hbm [shape: bf16[2,32], index: 0, kind: input, shape index: {}]
  %s1 = inlined_call_operand.hbm [shape: bf16[32,128], index: 1, kind: input, shape index: {}]
  %s2 = inlined_call_operand.vmem [shape: f32[1,128], index: 2, kind: input, shape index: {}]
  %s3 = inlined_call_operand.hbm [shape: bf16[128,128], index: 3, kind: input, shape index: {}]
  %s4 = inlined_call_operand.vmem [shape: f32[1,128], index: 4, kind: input, shape index: {}]
  %s5 = inlined_call_operand.hbm [shape: f32[2,128], index: 5, kind: output, shape index: {}]
  %s6 = sld [smem:[#allocation0]]
  $region42: #{tpu_custom_call.1} parent=0
    _
  %s8 = ssub.s32 1, %s6
  %s9 = scalar_select 0, %s8, %s6
  $region1: #{tpu_custom_call.1} parent=0
    #allocation2 [shape = 'u8[512]{0}', space=vmem, size = 0x400, scoped, tag = 'input window, operand 0, single buffered']
    #allocation3 [shape = 's32[1]{0}', space=sflag, size = 0x4, scoped, tag = 'scoped memory for tpu_custom_call.1']
    #allocation4 [shape = 's32[1]{0}', space=sflag, size = 0x4, scoped, tag = 'scoped memory for tpu_custom_call.1']
    #allocation5 [shape = 'u8[8192]{0}', space=vmem, size = 0x2000, scoped, tag = 'input window, operand 1, single buffered']
    #allocation6 [shape = 's32[1]{0}', space=sflag, size = 0x4, scoped, tag = 'scoped memory for tpu_custom_call.1']
    #allocation7 [shape = 'u8[32768]{0}', space=vmem, size = 0x8000, scoped, tag = 'input window, operand 3, single buffered']
    #allocation8 [shape = 'u8[1024]{0}', space=vmem, size = 0x400, scoped, tag = 'output window, operand 0, single buffered']
    %10 = vsyncpa [#allocation3], 0
    %11 = vsyncpa [#allocation6], 0
    %12 = vsyncpa [#allocation4], 0
    // Predicated region
    $region2: #{tpu_custom_call.1} parent=1 // pred_check
      _
    $region3: #{tpu_custom_call.1} parent=1 // pred_check_branch
      %14 = sbr.rel (0) target = $region5
    $region4: #{tpu_custom_call.1} parent=1 // pred_region
      %s16 = ssub.s32 16, 16
      %17 = vsyncadd [#allocation3], %s16
      %s19 = sshll.u32 [#allocation2], 4
      %s20 = int_to_ptr.vmem [resolvable:$true] %s19
      %22 = dma.hbm_to_vmem [thread:$0]  %s0, 16, %s20, [#allocation3]
    $region5: #{tpu_custom_call.1} parent=1 // pred_fallthru
      _
    // Predicated region
    $region6: #{tpu_custom_call.1} parent=1 // pred_check
      _
    $region7: #{tpu_custom_call.1} parent=1 // pred_check_branch
      %24 = sbr.rel (0) target = $region9
    $region8: #{tpu_custom_call.1} parent=1 // pred_region
      %s26 = ssub.s32 256, 256
      %27 = vsyncadd [#allocation6], %s26
      %s28 = sshll.u32 [#allocation5], 4
      %s29 = int_to_ptr.vmem [resolvable:$true] %s28
      %34 = dma.hbm_to_vmem [thread:$0]  %s1, 256, %s29, [#allocation6], 64, 64, 4
    $region9: #{tpu_custom_call.1} parent=1 // pred_fallthru
      _
    // Predicated region
    $region10: #{tpu_custom_call.1} parent=1 // pred_check
      _
    $region11: #{tpu_custom_call.1} parent=1 // pred_check_branch
      %36 = sbr.rel (0) target = $region13
    $region12: #{tpu_custom_call.1} parent=1 // pred_region
      _
    $region13: #{tpu_custom_call.1} parent=1 // pred_fallthru
      _
    // Predicated region
    $region14: #{tpu_custom_call.1} parent=1 // pred_check
      _
    $region15: #{tpu_custom_call.1} parent=1 // pred_check_branch
      %38 = sbr.rel (0) target = $region17
    $region16: #{tpu_custom_call.1} parent=1 // pred_region
      %s40 = ssub.s32 1024, 1024
      %41 = vsyncadd [#allocation6], %s40
      %s42 = sshll.u32 [#allocation7], 4
      %s43 = int_to_ptr.vmem [resolvable:$true] %s42
      %48 = dma.hbm_to_vmem [thread:$0]  %s3, 1024, %s43, [#allocation6], 64, 64, 4
    $region17: #{tpu_custom_call.1} parent=1 // pred_fallthru
      _
    // Predicated region
    $region18: #{tpu_custom_call.1} parent=1 // pred_check
      _
    $region19: #{tpu_custom_call.1} parent=1 // pred_check_branch
      %50 = sbr.rel (0) target = $region21
    $region20: #{tpu_custom_call.1} parent=1 // pred_region
      _
    $region21: #{tpu_custom_call.1} parent=1 // pred_fallthru
      _
    // Predicated region
    $region22: #{tpu_custom_call.1} parent=1 // pred_check
      _
    $region23: #{tpu_custom_call.1} parent=1 // pred_check_branch
      %52 = sbr.rel (0) target = $region25
    $region24: #{tpu_custom_call.1} parent=1 // pred_region
      %53 = dma.done [#allocation3], 16
    $region25: #{tpu_custom_call.1} parent=1 // pred_fallthru
      _
    // Predicated region
    $region26: #{tpu_custom_call.1} parent=1 // pred_check
      _
    $region27: #{tpu_custom_call.1} parent=1 // pred_check_branch
      %55 = sbr.rel (0) target = $region29
    $region28: #{tpu_custom_call.1} parent=1 // pred_region
      %56 = dma.done [#allocation6], 256
    $region29: #{tpu_custom_call.1} parent=1 // pred_fallthru
      _
    // Predicated region
    $region30: #{tpu_custom_call.1} parent=1 // pred_check
      _
    $region31: #{tpu_custom_call.1} parent=1 // pred_check_branch
      %58 = sbr.rel (0) target = $region33
    $region32: #{tpu_custom_call.1} parent=1 // pred_region
      %59 = dma.done [#allocation6], 1024
    $region33: #{tpu_custom_call.1} parent=1 // pred_fallthru
      _
    %v61 = vld [vmem:[#allocation2] sm:$0x1]
    %v62 = vld [vmem:[#allocation5] sm:$0xf]
    %v63 = vld [vmem:[#allocation5 + $0x4] sm:$0xf]
    %v64 = vld [vmem:[#allocation5 + $0x8] sm:$0xf]
    %v65 = vld [vmem:[#allocation5 + $0xc] sm:$0xf]
    %v66 = vld [vmem:[%s2] sm:$0x1]
    %v68 = vlaneseq
    %v69 = vshrl.u32 %v68, 7
    %v70 = vsub.s32 0, %v69
    %v71 = vrot.slane %v66, %v70
    %v77 = vunpack.c.l.b16 %v62
    %v78 = vunpack.c.l.b16 %v63
    %v79 = vunpack.c.l.b16 %v64
    %v80 = vunpack.c.l.b16 %v65
    %v81 = vpack.c.b16 %v78, %v77
    %v82 = vpack.c.b16 %v80, %v79
    %vm85 = vcmask 261120
    %v87 = vsel %vm85, %v61, 0
    %89 = vmatprep.subr.bf16.mxu0 0
    %90 = vmatpush1.bf16.msra.mxu0 0
    %91 = vmatprep.subr.bf16.mxu0 0
    %92 = vmatpush1.bf16.msra.mxu0 0
    %93 = vmatprep.subr.bf16.mxu0 0
    %94 = vmatpush1.bf16.msra.mxu0 0
    %95 = vmatprep.subr.bf16.mxu0 0
    %96 = vmatpush1.bf16.msra.mxu0 0
    %97 = vmatprep.subr.bf16.mxu0 0
    %98 = vmatpush1.bf16.msra.mxu0 0
    %99 = vmatprep.subr.bf16.mxu0 0
    %100 = vmatpush1.bf16.msra.mxu0 0
    %101 = vmatprep.subr.bf16.mxu0 0
    %102 = vmatpush1.bf16.msra.mxu0 %v82
    %103 = vmatprep.subr.bf16.mxu0 0
    %104 = vmatpush1.bf16.msra.mxu0 %v81
    %105 = vmatprep.subr.bf16.mxu0 0
    %106 = vmatpush2.bf16.msra.mxu0 0
    %107 = vmatprep.subr.bf16.mxu0 0
    %108 = vmatpush2.bf16.msra.mxu0 0
    %109 = vmatprep.subr.bf16.mxu0 0
    %110 = vmatpush2.bf16.msra.mxu0 0
    %111 = vmatprep.subr.bf16.mxu0 0
    %112 = vmatpush2.bf16.msra.mxu0 0
    %113 = vmatprep.subr.bf16.mxu0 0
    %114 = vmatpush2.bf16.msra.mxu0 0
    %115 = vmatprep.subr.bf16.mxu0 0
    %116 = vmatpush2.bf16.msra.mxu0 0
    %117 = vmatprep.subr.bf16.mxu0 0
    %118 = vmatpush2.bf16.msra.mxu0 0
    %119 = vmatprep.subr.bf16.mxu0 0
    %120 = vmatpush2.bf16.msra.mxu0 0
    %121 = vmatprep.mubr.bf16.mxu0 0
    %122 = vmatmul.mubr.bf16.gmra.mxu0 %v87
    %v123 = vpop.f32.mrf.mxu0
    %v124 = vadd.f32 %v71, %v123
    %v125 = vpop.f32.mrf.mxu0
    %v126 = vpop.f32.mrf.mxu0
    %v127 = vpop.f32.mrf.mxu0
    %128 = vdwg.mxu0
    %v129 = vsub.f32 0.0, %v124
    %v130 = vmul.f32 %v129, 1.442695
    %v131 = vpow.pop %v130
    %v132 = vadd.f32 %v131, 1.0
    %v133 = vrcp.pop %v132
    %v134 = vmul.f32 %v124, %v133
    %v135 = vpack.c.bf16 %v134, %v134
    %v136 = vld [vmem:[#allocation7] sm:$0xf]
    %v137 = vld [vmem:[#allocation7 + $0x4] sm:$0xf]
    %v138 = vld [vmem:[#allocation7 + $0x8] sm:$0xf]
    %v139 = vld [vmem:[#allocation7 + $0xc] sm:$0xf]
    %v140 = vld [vmem:[#allocation7 + $0x10] sm:$0xf]
    %v141 = vld [vmem:[#allocation7 + $0x14] sm:$0xf]
    %v142 = vld [vmem:[#allocation7 + $0x18] sm:$0xf]
    %v143 = vld [vmem:[#allocation7 + $0x1c] sm:$0xf]
    %v144 = vld [vmem:[#allocation7 + $0x20] sm:$0xf]
    %v145 = vld [vmem:[#allocation7 + $0x24] sm:$0xf]
    %v146 = vld [vmem:[#allocation7 + $0x28] sm:$0xf]
    %v147 = vld [vmem:[#allocation7 + $0x2c] sm:$0xf]
    %v148 = vld [vmem:[#allocation7 + $0x30] sm:$0xf]
    %v149 = vld [vmem:[#allocation7 + $0x34] sm:$0xf]
    %v150 = vld [vmem:[#allocation7 + $0x38] sm:$0xf]
    %v151 = vld [vmem:[#allocation7 + $0x3c] sm:$0xf]
    %v152 = vld [vmem:[%s4] sm:$0x1]
    %v154 = vlaneseq
    %v155 = vshrl.u32 %v154, 7
    %v156 = vsub.s32 0, %v155
    %v157 = vrot.slane %v152, %v156
    %v175 = vunpack.c.l.b16 %v136
    %v176 = vunpack.c.l.b16 %v137
    %v177 = vunpack.c.l.b16 %v138
    %v178 = vunpack.c.l.b16 %v139
    %v179 = vunpack.c.l.b16 %v140
    %v180 = vunpack.c.l.b16 %v141
    %v181 = vunpack.c.l.b16 %v142
    %v182 = vunpack.c.l.b16 %v143
    %v183 = vunpack.c.l.b16 %v144
    %v184 = vunpack.c.l.b16 %v145
    %v185 = vunpack.c.l.b16 %v146
    %v186 = vunpack.c.l.b16 %v147
    %v187 = vunpack.c.l.b16 %v148
    %v188 = vunpack.c.l.b16 %v149
    %v189 = vunpack.c.l.b16 %v150
    %v190 = vunpack.c.l.b16 %v151
    %v191 = vpack.c.b16 %v176, %v175
    %v192 = vpack.c.b16 %v178, %v177
    %v193 = vpack.c.b16 %v180, %v179
    %v194 = vpack.c.b16 %v182, %v181
    %v195 = vpack.c.b16 %v184, %v183
    %v196 = vpack.c.b16 %v186, %v185
    %v197 = vpack.c.b16 %v188, %v187
    %v198 = vpack.c.b16 %v190, %v189
    %207 = vmatprep.subr.bf16.mxu0 0
    %208 = vmatpush1.bf16.msra.mxu0 %v198
    %209 = vmatprep.subr.bf16.mxu0 0
    %210 = vmatpush1.bf16.msra.mxu0 %v197
    %211 = vmatprep.subr.bf16.mxu0 0
    %212 = vmatpush1.bf16.msra.mxu0 %v196
    %213 = vmatprep.subr.bf16.mxu0 0
    %214 = vmatpush1.bf16.msra.mxu0 %v195
    %215 = vmatprep.subr.bf16.mxu0 0
    %216 = vmatpush1.bf16.msra.mxu0 %v194
    %217 = vmatprep.subr.bf16.mxu0 0
    %218 = vmatpush1.bf16.msra.mxu0 %v193
    %219 = vmatprep.subr.bf16.mxu0 0
    %220 = vmatpush1.bf16.msra.mxu0 %v192
    %221 = vmatprep.subr.bf16.mxu0 0
    %222 = vmatpush1.bf16.msra.mxu0 %v191
    %223 = vmatprep.subr.bf16.mxu0 0
    %224 = vmatpush2.bf16.msra.mxu0 0
    %225 = vmatprep.subr.bf16.mxu0 0
    %226 = vmatpush2.bf16.msra.mxu0 0
    %227 = vmatprep.subr.bf16.mxu0 0
    %228 = vmatpush2.bf16.msra.mxu0 0
    %229 = vmatprep.subr.bf16.mxu0 0
    %230 = vmatpush2.bf16.msra.mxu0 0
    %231 = vmatprep.subr.bf16.mxu0 0
    %232 = vmatpush2.bf16.msra.mxu0 0
    %233 = vmatprep.subr.bf16.mxu0 0
    %234 = vmatpush2.bf16.msra.mxu0 0
    %235 = vmatprep.subr.bf16.mxu0 0
    %236 = vmatpush2.bf16.msra.mxu0 0
    %237 = vmatprep.subr.bf16.mxu0 0
    %238 = vmatpush2.bf16.msra.mxu0 0
    %239 = vmatprep.mubr.bf16.mxu0 0
    %240 = vmatmul.mubr.bf16.gmra.mxu0 %v135
    %v241 = vpop.f32.mrf.mxu0
    %v242 = vadd.f32 %v157, %v241
    %v243 = vpop.f32.mrf.mxu0
    %v244 = vpop.f32.mrf.mxu0
    %v245 = vpop.f32.mrf.mxu0
    %246 = vdwg.mxu0
    %247 = vst [vmem:[#allocation8] sm:$0x3] %v242
    // Predicated region
    $region34: #{tpu_custom_call.1} parent=1 // pred_check
      _
    $region35: #{tpu_custom_call.1} parent=1 // pred_check_branch
      %249 = sbr.rel (0) target = $region37
    $region36: #{tpu_custom_call.1} parent=1 // pred_region
      %s251 = ssub.s32 32, 32
      %252 = vsyncadd [#allocation4], %s251
      %s254 = sshll.u32 [#allocation8], 4
      %s255 = int_to_ptr.vmem [resolvable:$true] %s254
      %257 = dma.vmem_to_hbm [thread:$0]  %s255, 32, %s5, [#allocation4]
    $region37: #{tpu_custom_call.1} parent=1 // pred_fallthru
      _
    // Predicated region
    $region38: #{tpu_custom_call.1} parent=1 // pred_check
      _
    $region39: #{tpu_custom_call.1} parent=1 // pred_check_branch
      %259 = sbr.rel (0) target = $region41
    $region40: #{tpu_custom_call.1} parent=1 // pred_region
      %260 = dma.done [#allocation4], 32
    $region41: #{tpu_custom_call.1} parent=1 // pred_fallthru
      _
    %261 = vsyncpa [#allocation3], 1
    %262 = vsyncpa [#allocation6], 1
    %263 = vsyncpa [#allocation4], 1

</llo_original>
